<compile_context>
chip_gen: v5e
topology: v5e:2x2
jax: 0.10.0
libtpu: 0.0.40
codegen_flags: <defaults>
</compile_context>

<pallas_src>
import functools

import numpy as np
import jax
import jax.numpy as jnp
from jax.experimental import pallas as pl
from jax.experimental.pallas import tpu as pltpu


def _mha_kernel(x_ref, wq_ref, bq_ref, wk_ref, wv_ref, bv_ref, wo_ref, bo_ref,
                o_ref, k_sc, v_sc, *, n_head, causal, approx_recip):
    qi = pl.program_id(1)
    T = x_ref.shape[1]
    D = x_ref.shape[2]
    tq = o_ref.shape[1]
    hd = D // n_head
    cdt = k_sc.dtype                     # compute dtype for MXU operands

    # ---- K / V projections for the whole sequence: computed once per batch
    # element (first query tile) and cached in VMEM scratch for later tiles.
    @pl.when(qi == 0)
    def _():
        xs = x_ref[0].astype(cdt)                                   # (T, D)
        k_sc[...] = jnp.dot(xs, wk_ref[...],                        # scale folded
                            preferred_element_type=jnp.float32).astype(cdt)
        v_sc[...] = (jnp.dot(xs, wv_ref[...],
                             preferred_element_type=jnp.float32)
                     + bv_ref[...]).astype(cdt)

    # ---- Q projection for this query tile only (scale folded into Wq/bq).
    q_start = pl.multiple_of(qi * tq, tq)
    xq = x_ref[0, pl.ds(q_start, tq), :].astype(cdt)                # (tq, D)
    q = (jnp.dot(xq, wq_ref[...], preferred_element_type=jnp.float32)
         + bq_ref[...]).astype(cdt)                                 # (tq, D)

    # ---- causal mask generated in-kernel (no HBM mask, hoisted out of heads).
    if causal:
        q_pos = q_start + jax.lax.broadcasted_iota(jnp.int32, (tq, T), 0)
        k_pos = jax.lax.broadcasted_iota(jnp.int32, (tq, T), 1)
        keep = k_pos <= q_pos                                       # (tq, T)

    acc = jnp.zeros((tq, D), jnp.float32)
    for h in range(n_head):              # static unroll; n_head is small
        sl = slice(h * hd, (h + 1) * hd)
        qh = q[:, sl]                    # (tq, hd)
        kh = k_sc[:, sl]                 # (T, hd)
        vh = v_sc[:, sl]                 # (T, hd)

        # scores for this (query tile, head): (tq, T), f32 accumulation
        s = jnp.einsum("qd,kd->qk", qh, kh,
                       preferred_element_type=jnp.float32)
        if causal:
            s = jnp.where(keep, s, -jnp.inf)

        # numerically-stable softmax in f32 along the key axis
        s = s - jnp.max(s, axis=-1, keepdims=True)
        p = jnp.exp(s)
        p = p * pl.reciprocal(jnp.sum(p, axis=-1, keepdims=True),
                              approx=approx_recip)

        head = jnp.dot(p.astype(cdt), vh,
                       preferred_element_type=jnp.float32)          # (tq, hd)
        # fused output projection: lane-dense (tq, D) accumulate, no concat.
        acc = acc + jnp.dot(head.astype(cdt), wo_ref[sl, :],
                            preferred_element_type=jnp.float32)

    o_ref[0] = (acc + bo_ref[...]).astype(o_ref.dtype)


def _pick_q_tile(T):
    for t in (128, 64, 32, 16, 8):
        if T % t == 0:
            return t
    return T


def multi_head_attention(x, params, *, n_head, causal=True,
                         compute_dtype=None, q_tile=None):
    """Forward pass of the Whisper MultiHeadAttention module (self-attention).

    x: (B, T, D).  params hold PyTorch-layout weights (W is (out, in)):
    wq/bq, wk (no bias), wv/bv, wo/bo with biases of shape (D,).
    compute_dtype: dtype used for MXU operands (defaults to x.dtype, matching
    the module's `weight.to(x.dtype)`); accumulation / softmax stay f32.
    """
    B, T, D = x.shape
    assert D % n_head == 0
    hd = D // n_head
    cdt = np.dtype(compute_dtype) if compute_dtype is not None else np.dtype(x.dtype)
    approx_recip = bool(cdt != np.dtype(jnp.float32))
    scale = float(hd) ** (-0.25)
    f32 = jnp.float32

    # Pre-transpose once in the wrapper; fold q/k scale into Wq/bq and Wk.
    wq_t = (params["wq"].astype(f32).T * scale).astype(cdt)
    bq = (params["bq"].astype(f32) * scale).reshape(1, D)
    wk_t = (params["wk"].astype(f32).T * scale).astype(cdt)
    wv_t = params["wv"].astype(cdt).T
    bv = params["bv"].astype(f32).reshape(1, D)
    wo_t = params["wo"].astype(cdt).T
    bo = params["bo"].astype(f32).reshape(1, D)

    tq = q_tile if q_tile is not None else _pick_q_tile(T)
    assert T % tq == 0
    nq = T // tq

    const2d = lambda b, qi: (0, 0)
    kernel = functools.partial(_mha_kernel, n_head=n_head, causal=causal,
                               approx_recip=approx_recip)

    return pl.pallas_call(
        kernel,
        out_shape=jax.ShapeDtypeStruct((B, T, D), x.dtype),
        grid_spec=pltpu.PrefetchScalarGridSpec(
            num_scalar_prefetch=0,
            grid=(B, nq),
            in_specs=[
                pl.BlockSpec((1, T, D), lambda b, qi: (b, 0, 0)),   # x (full seq)
                pl.BlockSpec((D, D), const2d),                      # Wq.T * scale
                pl.BlockSpec((1, D), const2d),                      # bq * scale
                pl.BlockSpec((D, D), const2d),                      # Wk.T * scale
                pl.BlockSpec((D, D), const2d),                      # Wv.T
                pl.BlockSpec((1, D), const2d),                      # bv
                pl.BlockSpec((D, D), const2d),                      # Wo.T
                pl.BlockSpec((1, D), const2d),                      # bo
            ],
            out_specs=pl.BlockSpec((1, tq, D), lambda b, qi: (b, qi, 0)),
            scratch_shapes=[
                pltpu.VMEM((T, D), cdt),    # cached K (whole sequence)
                pltpu.VMEM((T, D), cdt),    # cached V (whole sequence)
            ],
        ),
        compiler_params=pltpu.CompilerParams(
            # query-tile axis carries the K/V scratch cache computed at qi == 0,
            # so it must stay "arbitrary"; batch axis is megacore-parallel.
            dimension_semantics=("parallel", "arbitrary"),
            vmem_limit_bytes=48 * 1024 * 1024,
        ),
    )(x, wq_t, bq, wk_t, wv_t, bv, wo_t, bo)


# ------------------------- verification helpers -------------------------

def _make_params(key, D):
    ks = jax.random.split(key, 7)
    s = 1.0 / jnp.sqrt(D)
    return {
        "wq": jax.random.normal(ks[0], (D, D), jnp.float32) * s,
        "bq": jax.random.normal(ks[1], (D,), jnp.float32) * 0.1,
        "wk": jax.random.normal(ks[2], (D, D), jnp.float32) * s,
        "wv": jax.random.normal(ks[3], (D, D), jnp.float32) * s,
        "bv": jax.random.normal(ks[4], (D,), jnp.float32) * 0.1,
        "wo": jax.random.normal(ks[5], (D, D), jnp.float32) * s,
        "bo": jax.random.normal(ks[6], (D,), jnp.float32) * 0.1,
    }


def _reference(x, params, n_head, causal=True):
    # pure-JAX mirror of the PyTorch forward
    B, T, D = x.shape
    hd = D // n_head
    scale = float(hd) ** (-0.25)
    q = x @ params["wq"].T + params["bq"]
    k = x @ params["wk"].T
    v = x @ params["wv"].T + params["bv"]
    qh = q.reshape(B, T, n_head, hd).transpose(0, 2, 1, 3) * scale
    kh = k.reshape(B, T, n_head, hd).transpose(0, 2, 3, 1) * scale
    vh = v.reshape(B, T, n_head, hd).transpose(0, 2, 1, 3)
    qk = qh @ kh
    if causal:
        qk = qk + jnp.triu(jnp.full((T, T), -jnp.inf, jnp.float32), k=1)
    w = jax.nn.softmax(qk.astype(jnp.float32), axis=-1).astype(q.dtype)
    wv = (w @ vh).transpose(0, 2, 1, 3).reshape(B, T, D)
    return wv @ params["wo"].T + params["bo"]


if __name__ == "__main__":
    key = jax.random.PRNGKey(0)

    # (B, T, D, H, compute_dtype, tolerance)
    configs = [
        (2, 8, 32, 4, None, 2e-3),           # module-faithful f32, single q tile
        (2, 256, 128, 4, None, 2e-2),         # multi q-tile path (tq=128, nq=2)
        (2, 8, 32, 4, jnp.bfloat16, 5e-2),    # bf16 MXU path, f32 softmax/accum
    ]
    for B, T, D, H, cdt, tol in configs:
        kp, kx, key = jax.random.split(key, 3)
        params = _make_params(kp, D)
        x = jax.random.normal(kx, (B, T, D), jnp.float32)

        out = multi_head_attention(x, params, n_head=H, causal=True,
                                   compute_dtype=cdt)
        out = jax.block_until_ready(out)
        ref = _reference(x, params, H, causal=True)

        assert out.shape == (B, T, D)
        err = jnp.max(jnp.abs(out - ref))
        assert jnp.isfinite(err) and err < tol, (
            f"mismatch (B={B} T={T} D={D} H={H} cdt={cdt}): "
            f"max abs err {err} >= {tol}")

    print("KERNEL_OK")
</pallas_src>

<mosaic_0001>
module attributes {stable_mosaic.version = 11 : i64} {
  func.func @_mha_kernel(%arg0: i32, %arg1: i32, %arg2: memref<1x8x32xf32, #tpu.memory_space<vmem>>, %arg3: memref<32x32xf32, #tpu.memory_space<vmem>>, %arg4: memref<1x32xf32, #tpu.memory_space<vmem>>, %arg5: memref<32x32xf32, #tpu.memory_space<vmem>>, %arg6: memref<32x32xf32, #tpu.memory_space<vmem>>, %arg7: memref<1x32xf32, #tpu.memory_space<vmem>>, %arg8: memref<32x32xf32, #tpu.memory_space<vmem>>, %arg9: memref<1x32xf32, #tpu.memory_space<vmem>>, %arg10: memref<1x8x32xf32, #tpu.memory_space<vmem>>, %arg11: memref<8x32xf32, #tpu.memory_space<vmem>>, %arg12: memref<8x32xf32, #tpu.memory_space<vmem>>) attributes {dimension_semantics = [#tpu.dimension_semantics<parallel>, #tpu.dimension_semantics<arbitrary>], iteration_bounds = array<i64: 2, 1>, scalar_prefetch = 0 : i64, scratch_operands = 2 : i64, tpu.core_type = #tpu.core_type<tc>, window_params = [{transform_indices = @transform_0, window_bounds = array<i64: 1, 8, 32>}, {pipeline_mode = #tpu.pipeline_mode<synchronous>, transform_indices = @transform_1, window_bounds = array<i64: 32, 32>}, {pipeline_mode = #tpu.pipeline_mode<synchronous>, transform_indices = @transform_2, window_bounds = array<i64: 1, 32>}, {pipeline_mode = #tpu.pipeline_mode<synchronous>, transform_indices = @transform_3, window_bounds = array<i64: 32, 32>}, {pipeline_mode = #tpu.pipeline_mode<synchronous>, transform_indices = @transform_4, window_bounds = array<i64: 32, 32>}, {pipeline_mode = #tpu.pipeline_mode<synchronous>, transform_indices = @transform_5, window_bounds = array<i64: 1, 32>}, {pipeline_mode = #tpu.pipeline_mode<synchronous>, transform_indices = @transform_6, window_bounds = array<i64: 32, 32>}, {pipeline_mode = #tpu.pipeline_mode<synchronous>, transform_indices = @transform_7, window_bounds = array<i64: 1, 32>}, {transform_indices = @transform_8, window_bounds = array<i64: 1, 8, 32>}]} {
    %c0_i32 = arith.constant 0 : i32
    %0 = arith.cmpi eq, %arg1, %c0_i32 : i32
    %1 = arith.extui %0 : i1 to i32
    %c0_i32_0 = arith.constant 0 : i32
    %2 = arith.cmpi ne, %1, %c0_i32_0 : i32
    scf.if %2 {
      %c0_57 = arith.constant 0 : index
      %c0_58 = arith.constant 0 : index
      %c0_59 = arith.constant 0 : index
      %105 = vector.load %arg2[%c0_57, %c0_58, %c0_59] : memref<1x8x32xf32, #tpu.memory_space<vmem>>, vector<1x8x32xf32>
      %106 = vector.shape_cast %105 : vector<1x8x32xf32> to vector<8x32xf32>
      %c0_60 = arith.constant 0 : index
      %c0_61 = arith.constant 0 : index
      %107 = vector.load %arg5[%c0_60, %c0_61] : memref<32x32xf32, #tpu.memory_space<vmem>>, vector<32x32xf32>
      %cst_62 = arith.constant dense<0.000000e+00> : vector<8x32xf32>
      %108 = tpu.matmul %106, %107, %cst_62 {dimension_numbers = #tpu.dot_dimension_numbers<[1], [0], [0], [1], [0, 0, 1, 1], [], []>} : vector<8x32xf32>, vector<32x32xf32>, vector<8x32xf32> -> vector<8x32xf32>
      %c0_63 = arith.constant 0 : index
      %c0_64 = arith.constant 0 : index
      %109 = vector.load %arg11[%c0_63, %c0_64] : memref<8x32xf32, #tpu.memory_space<vmem>>, vector<8x32xf32>
      tpu.vector_store %arg11[%c0_63, %c0_64], %108 {strides = array<i32>} : memref<8x32xf32, #tpu.memory_space<vmem>>, vector<8x32xf32>,
      %c0_65 = arith.constant 0 : index
      %c0_66 = arith.constant 0 : index
      %110 = vector.load %arg6[%c0_65, %c0_66] : memref<32x32xf32, #tpu.memory_space<vmem>>, vector<32x32xf32>
      %cst_67 = arith.constant dense<0.000000e+00> : vector<8x32xf32>
      %111 = tpu.matmul %106, %110, %cst_67 {dimension_numbers = #tpu.dot_dimension_numbers<[1], [0], [0], [1], [0, 0, 1, 1], [], []>} : vector<8x32xf32>, vector<32x32xf32>, vector<8x32xf32> -> vector<8x32xf32>
      %c0_68 = arith.constant 0 : index
      %c0_69 = arith.constant 0 : index
      %112 = vector.load %arg7[%c0_68, %c0_69] : memref<1x32xf32, #tpu.memory_space<vmem>>, vector<1x32xf32>
      %113 = vector.broadcast %112 : vector<1x32xf32> to vector<8x32xf32>
      %114 = arith.addf %111, %113 : vector<8x32xf32>
      %c0_70 = arith.constant 0 : index
      %c0_71 = arith.constant 0 : index
      %115 = vector.load %arg12[%c0_70, %c0_71] : memref<8x32xf32, #tpu.memory_space<vmem>>, vector<8x32xf32>
      tpu.vector_store %arg12[%c0_70, %c0_71], %114 {strides = array<i32>} : memref<8x32xf32, #tpu.memory_space<vmem>>, vector<8x32xf32>,
    } else {
    }
    %c8_i32 = arith.constant 8 : i32
    %3 = arith.muli %arg1, %c8_i32 : i32
    %4 = tpu.assume_multiple %3, 8 : i32
    %c0 = arith.constant 0 : index
    %5 = arith.index_cast %4 : i32 to index
    %c0_1 = arith.constant 0 : index
    %6 = vector.load %arg2[%c0, %5, %c0_1] : memref<1x8x32xf32, #tpu.memory_space<vmem>>, vector<1x8x32xf32>
    %7 = vector.shape_cast %6 : vector<1x8x32xf32> to vector<8x32xf32>
    %c0_2 = arith.constant 0 : index
    %c0_3 = arith.constant 0 : index
    %8 = vector.load %arg3[%c0_2, %c0_3] : memref<32x32xf32, #tpu.memory_space<vmem>>, vector<32x32xf32>
    %cst = arith.constant dense<0.000000e+00> : vector<8x32xf32>
    %9 = tpu.matmul %7, %8, %cst {dimension_numbers = #tpu.dot_dimension_numbers<[1], [0], [0], [1], [0, 0, 1, 1], [], []>} : vector<8x32xf32>, vector<32x32xf32>, vector<8x32xf32> -> vector<8x32xf32>
    %c0_4 = arith.constant 0 : index
    %c0_5 = arith.constant 0 : index
    %10 = vector.load %arg4[%c0_4, %c0_5] : memref<1x32xf32, #tpu.memory_space<vmem>>, vector<1x32xf32>
    %11 = vector.broadcast %10 : vector<1x32xf32> to vector<8x32xf32>
    %12 = arith.addf %9, %11 : vector<8x32xf32>
    %13 = tpu.iota {dimensions = array<i32: 0>} : vector<8x8xi32>
    %14 = vector.broadcast %4 : i32 to vector<8x8xi32>
    %15 = arith.addi %14, %13 : vector<8x8xi32>
    %16 = tpu.iota {dimensions = array<i32: 1>} : vector<8x8xi32>
    %17 = arith.cmpi sle, %16, %15 : vector<8x8xi32>
    %cst_6 = arith.constant 0.000000e+00 : f32
    %18 = vector.broadcast %cst_6 : f32 to vector<8x32xf32>
    %19 = vector.extract_strided_slice %12 {offsets = [0, 0], sizes = [8, 8], strides = [1, 1]} : vector<8x32xf32> to vector<8x8xf32>
    %c0_7 = arith.constant 0 : index
    %c0_8 = arith.constant 0 : index
    %20 = vector.load %arg11[%c0_7, %c0_8] : memref<8x32xf32, #tpu.memory_space<vmem>>, vector<8x8xf32>
    %c0_9 = arith.constant 0 : index
    %c0_10 = arith.constant 0 : index
    %21 = vector.load %arg12[%c0_9, %c0_10] : memref<8x32xf32, #tpu.memory_space<vmem>>, vector<8x8xf32>
    "tpu.trace_start"() <{level = 10 : i32, message = "qd,kd->qk"}> : () -> ()
    %cst_11 = arith.constant dense<0.000000e+00> : vector<8x8xf32>
    %22 = tpu.matmul %19, %20, %cst_11 {dimension_numbers = #tpu.dot_dimension_numbers<[1], [1], [0], [0], [0, 0, 1, 0], [], []>} : vector<8x8xf32>, vector<8x8xf32>, vector<8x8xf32> -> vector<8x8xf32>
    %cst_12 = arith.constant 0xFF800000 : f32
    "tpu.trace_stop"() : () -> ()
    %23 = vector.broadcast %cst_12 : f32 to vector<8x8xf32>
    %24 = arith.select %17, %22, %23 : vector<8x8xi1>, vector<8x8xf32>
    %cst_13 = arith.constant dense<0xFF800000> : vector<8xf32>
    %25 = vector.multi_reduction <maximumf>, %24, %cst_13 [1] : vector<8x8xf32> to vector<8xf32>
    %26 = vector.shape_cast %25 : vector<8xf32> to vector<8x1xf32>
    %27 = vector.broadcast %26 : vector<8x1xf32> to vector<8x8xf32>
    %28 = arith.subf %24, %27 : vector<8x8xf32>
    %29 = math.exp %28 : vector<8x8xf32>
    %cst_14 = arith.constant dense<0.000000e+00> : vector<8xf32>
    %30 = vector.multi_reduction <add>, %29, %cst_14 [1] : vector<8x8xf32> to vector<8xf32>
    %31 = vector.shape_cast %30 : vector<8xf32> to vector<8x1xf32>
    %32 = tpu.reciprocal %31 : vector<8x1xf32> -> vector<8x1xf32>
    %33 = vector.broadcast %32 : vector<8x1xf32> to vector<8x8xf32>
    %34 = arith.mulf %29, %33 : vector<8x8xf32>
    %cst_15 = arith.constant dense<0.000000e+00> : vector<8x8xf32>
    %35 = tpu.matmul %34, %21, %cst_15 {dimension_numbers = #tpu.dot_dimension_numbers<[1], [0], [0], [1], [0, 0, 1, 1], [], []>} : vector<8x8xf32>, vector<8x8xf32>, vector<8x8xf32> -> vector<8x8xf32>
    %c0_16 = arith.constant 0 : index
    %c0_17 = arith.constant 0 : index
    %36 = vector.load %arg8[%c0_16, %c0_17] : memref<32x32xf32, #tpu.memory_space<vmem>>, vector<8x32xf32>
    %cst_18 = arith.constant dense<0.000000e+00> : vector<8x32xf32>
    %37 = tpu.matmul %35, %36, %cst_18 {dimension_numbers = #tpu.dot_dimension_numbers<[1], [0], [0], [1], [0, 0, 1, 1], [], []>} : vector<8x8xf32>, vector<8x32xf32>, vector<8x32xf32> -> vector<8x32xf32>
    %38 = arith.addf %18, %37 : vector<8x32xf32>
    %39 = vector.extract_strided_slice %12 {offsets = [0, 8], sizes = [8, 8], strides = [1, 1]} : vector<8x32xf32> to vector<8x8xf32>
    %c0_19 = arith.constant 0 : index
    %c8 = arith.constant 8 : index
    %40 = vector.load %arg11[%c0_19, %c8] : memref<8x32xf32, #tpu.memory_space<vmem>>, vector<8x8xf32>
    %c0_20 = arith.constant 0 : index
    %c8_21 = arith.constant 8 : index
    %41 = vector.load %arg12[%c0_20, %c8_21] : memref<8x32xf32, #tpu.memory_space<vmem>>, vector<8x8xf32>
    "tpu.trace_start"() <{level = 10 : i32, message = "qd,kd->qk"}> : () -> ()
    %cst_22 = arith.constant dense<0.000000e+00> : vector<8x8xf32>
    %42 = tpu.matmul %39, %40, %cst_22 {dimension_numbers = #tpu.dot_dimension_numbers<[1], [1], [0], [0], [0, 0, 1, 0], [], []>} : vector<8x8xf32>, vector<8x8xf32>, vector<8x8xf32> -> vector<8x8xf32>
    %cst_23 = arith.constant 0xFF800000 : f32
    "tpu.trace_stop"() : () -> ()
    %43 = vector.broadcast %cst_23 : f32 to vector<8x8xf32>
    %44 = arith.select %17, %42, %43 : vector<8x8xi1>, vector<8x8xf32>
    %cst_24 = arith.constant dense<0xFF800000> : vector<8xf32>
    %45 = vector.multi_reduction <maximumf>, %44, %cst_24 [1] : vector<8x8xf32> to vector<8xf32>
    %46 = vector.shape_cast %45 : vector<8xf32> to vector<8x1xf32>
    %47 = vector.broadcast %46 : vector<8x1xf32> to vector<8x8xf32>
    %48 = arith.subf %44, %47 : vector<8x8xf32>
    %49 = math.exp %48 : vector<8x8xf32>
    %cst_25 = arith.constant dense<0.000000e+00> : vector<8xf32>
    %50 = vector.multi_reduction <add>, %49, %cst_25 [1] : vector<8x8xf32> to vector<8xf32>
    %51 = vector.shape_cast %50 : vector<8xf32> to vector<8x1xf32>
    %52 = tpu.reciprocal %51 : vector<8x1xf32> -> vector<8x1xf32>
    %53 = vector.broadcast %52 : vector<8x1xf32> to vector<8x8xf32>
    %54 = arith.mulf %49, %53 : vector<8x8xf32>
    %cst_26 = arith.constant dense<0.000000e+00> : vector<8x8xf32>
    %55 = tpu.matmul %54, %41, %cst_26 {dimension_numbers = #tpu.dot_dimension_numbers<[1], [0], [0], [1], [0, 0, 1, 1], [], []>} : vector<8x8xf32>, vector<8x8xf32>, vector<8x8xf32> -> vector<8x8xf32>
    %c8_27 = arith.constant 8 : index
    %c0_28 = arith.constant 0 : index
    %56 = vector.load %arg8[%c8_27, %c0_28] : memref<32x32xf32, #tpu.memory_space<vmem>>, vector<8x32xf32>
    %cst_29 = arith.constant dense<0.000000e+00> : vector<8x32xf32>
    %57 = tpu.matmul %55, %56, %cst_29 {dimension_numbers = #tpu.dot_dimension_numbers<[1], [0], [0], [1], [0, 0, 1, 1], [], []>} : vector<8x8xf32>, vector<8x32xf32>, vector<8x32xf32> -> vector<8x32xf32>
    %58 = arith.addf %38, %57 : vector<8x32xf32>
    %59 = vector.extract_strided_slice %12 {offsets = [0, 16], sizes = [8, 8], strides = [1, 1]} : vector<8x32xf32> to vector<8x8xf32>
    %c0_30 = arith.constant 0 : index
    %c16 = arith.constant 16 : index
    %60 = vector.load %arg11[%c0_30, %c16] : memref<8x32xf32, #tpu.memory_space<vmem>>, vector<8x8xf32>
    %c0_31 = arith.constant 0 : index
    %c16_32 = arith.constant 16 : index
    %61 = vector.load %arg12[%c0_31, %c16_32] : memref<8x32xf32, #tpu.memory_space<vmem>>, vector<8x8xf32>
    "tpu.trace_start"() <{level = 10 : i32, message = "qd,kd->qk"}> : () -> ()
    %cst_33 = arith.constant dense<0.000000e+00> : vector<8x8xf32>
    %62 = tpu.matmul %59, %60, %cst_33 {dimension_numbers = #tpu.dot_dimension_numbers<[1], [1], [0], [0], [0, 0, 1, 0], [], []>} : vector<8x8xf32>, vector<8x8xf32>, vector<8x8xf32> -> vector<8x8xf32>
    %cst_34 = arith.constant 0xFF800000 : f32
    "tpu.trace_stop"() : () -> ()
    %63 = vector.broadcast %cst_34 : f32 to vector<8x8xf32>
    %64 = arith.select %17, %62, %63 : vector<8x8xi1>, vector<8x8xf32>
    %cst_35 = arith.constant dense<0xFF800000> : vector<8xf32>
    %65 = vector.multi_reduction <maximumf>, %64, %cst_35 [1] : vector<8x8xf32> to vector<8xf32>
    %66 = vector.shape_cast %65 : vector<8xf32> to vector<8x1xf32>
    %67 = vector.broadcast %66 : vector<8x1xf32> to vector<8x8xf32>
    %68 = arith.subf %64, %67 : vector<8x8xf32>
    %69 = math.exp %68 : vector<8x8xf32>
    %cst_36 = arith.constant dense<0.000000e+00> : vector<8xf32>
    %70 = vector.multi_reduction <add>, %69, %cst_36 [1] : vector<8x8xf32> to vector<8xf32>
    %71 = vector.shape_cast %70 : vector<8xf32> to vector<8x1xf32>
    %72 = tpu.reciprocal %71 : vector<8x1xf32> -> vector<8x1xf32>
    %73 = vector.broadcast %72 : vector<8x1xf32> to vector<8x8xf32>
    %74 = arith.mulf %69, %73 : vector<8x8xf32>
    %cst_37 = arith.constant dense<0.000000e+00> : vector<8x8xf32>
    %75 = tpu.matmul %74, %61, %cst_37 {dimension_numbers = #tpu.dot_dimension_numbers<[1], [0], [0], [1], [0, 0, 1, 1], [], []>} : vector<8x8xf32>, vector<8x8xf32>, vector<8x8xf32> -> vector<8x8xf32>
    %c16_38 = arith.constant 16 : index
    %c0_39 = arith.constant 0 : index
    %76 = vector.load %arg8[%c16_38, %c0_39] : memref<32x32xf32, #tpu.memory_space<vmem>>, vector<8x32xf32>
    %cst_40 = arith.constant dense<0.000000e+00> : vector<8x32xf32>
    %77 = tpu.matmul %75, %76, %cst_40 {dimension_numbers = #tpu.dot_dimension_numbers<[1], [0], [0], [1], [0, 0, 1, 1], [], []>} : vector<8x8xf32>, vector<8x32xf32>, vector<8x32xf32> -> vector<8x32xf32>
    %78 = arith.addf %58, %77 : vector<8x32xf32>
    %79 = vector.extract_strided_slice %12 {offsets = [0, 24], sizes = [8, 8], strides = [1, 1]} : vector<8x32xf32> to vector<8x8xf32>
    %c0_41 = arith.constant 0 : index
    %c24 = arith.constant 24 : index
    %80 = vector.load %arg11[%c0_41, %c24] : memref<8x32xf32, #tpu.memory_space<vmem>>, vector<8x8xf32>
    %c0_42 = arith.constant 0 : index
    %c24_43 = arith.constant 24 : index
    %81 = vector.load %arg12[%c0_42, %c24_43] : memref<8x32xf32, #tpu.memory_space<vmem>>, vector<8x8xf32>
    "tpu.trace_start"() <{level = 10 : i32, message = "qd,kd->qk"}> : () -> ()
    %cst_44 = arith.constant dense<0.000000e+00> : vector<8x8xf32>
    %82 = tpu.matmul %79, %80, %cst_44 {dimension_numbers = #tpu.dot_dimension_numbers<[1], [1], [0], [0], [0, 0, 1, 0], [], []>} : vector<8x8xf32>, vector<8x8xf32>, vector<8x8xf32> -> vector<8x8xf32>
    %cst_45 = arith.constant 0xFF800000 : f32
    "tpu.trace_stop"() : () -> ()
    %83 = vector.broadcast %cst_45 : f32 to vector<8x8xf32>
    %84 = arith.select %17, %82, %83 : vector<8x8xi1>, vector<8x8xf32>
    %cst_46 = arith.constant dense<0xFF800000> : vector<8xf32>
    %85 = vector.multi_reduction <maximumf>, %84, %cst_46 [1] : vector<8x8xf32> to vector<8xf32>
    %86 = vector.shape_cast %85 : vector<8xf32> to vector<8x1xf32>
    %87 = vector.broadcast %86 : vector<8x1xf32> to vector<8x8xf32>
    %88 = arith.subf %84, %87 : vector<8x8xf32>
    %89 = math.exp %88 : vector<8x8xf32>
    %cst_47 = arith.constant dense<0.000000e+00> : vector<8xf32>
    %90 = vector.multi_reduction <add>, %89, %cst_47 [1] : vector<8x8xf32> to vector<8xf32>
    %91 = vector.shape_cast %90 : vector<8xf32> to vector<8x1xf32>
    %92 = tpu.reciprocal %91 : vector<8x1xf32> -> vector<8x1xf32>
    %93 = vector.broadcast %92 : vector<8x1xf32> to vector<8x8xf32>
    %94 = arith.mulf %89, %93 : vector<8x8xf32>
    %cst_48 = arith.constant dense<0.000000e+00> : vector<8x8xf32>
    %95 = tpu.matmul %94, %81, %cst_48 {dimension_numbers = #tpu.dot_dimension_numbers<[1], [0], [0], [1], [0, 0, 1, 1], [], []>} : vector<8x8xf32>, vector<8x8xf32>, vector<8x8xf32> -> vector<8x8xf32>
    %c24_49 = arith.constant 24 : index
    %c0_50 = arith.constant 0 : index
    %96 = vector.load %arg8[%c24_49, %c0_50] : memref<32x32xf32, #tpu.memory_space<vmem>>, vector<8x32xf32>
    %cst_51 = arith.constant dense<0.000000e+00> : vector<8x32xf32>
    %97 = tpu.matmul %95, %96, %cst_51 {dimension_numbers = #tpu.dot_dimension_numbers<[1], [0], [0], [1], [0, 0, 1, 1], [], []>} : vector<8x8xf32>, vector<8x32xf32>, vector<8x32xf32> -> vector<8x32xf32>
    %98 = arith.addf %78, %97 : vector<8x32xf32>
    %c0_52 = arith.constant 0 : index
    %c0_53 = arith.constant 0 : index
    %99 = vector.load %arg9[%c0_52, %c0_53] : memref<1x32xf32, #tpu.memory_space<vmem>>, vector<1x32xf32>
    %100 = vector.broadcast %99 : vector<1x32xf32> to vector<8x32xf32>
    %101 = arith.addf %98, %100 : vector<8x32xf32>
    %c0_54 = arith.constant 0 : index
    %c0_55 = arith.constant 0 : index
    %c0_56 = arith.constant 0 : index
    %102 = vector.load %arg10[%c0_54, %c0_55, %c0_56] : memref<1x8x32xf32, #tpu.memory_space<vmem>>, vector<1x8x32xf32>
    %103 = vector.shape_cast %102 : vector<1x8x32xf32> to vector<8x32xf32>
    %104 = vector.shape_cast %101 : vector<8x32xf32> to vector<1x8x32xf32>
    tpu.vector_store %arg10[%c0_54, %c0_55, %c0_56], %104 {strides = array<i32>} : memref<1x8x32xf32, #tpu.memory_space<vmem>>, vector<1x8x32xf32>,
    return
  }
  func.func @transform_0(%arg0: i32, %arg1: i32) -> (i32, i32, i32) {
    %c0_i32 = arith.constant 0 : i32
    %c0_i32_0 = arith.constant 0 : i32
    %c0_i32_1 = arith.constant 0 : i32
    return %arg0, %c0_i32, %c0_i32_0 : i32, i32, i32
  }
  func.func @transform_1(%arg0: i32, %arg1: i32) -> (i32, i32) {
    %c0_i32 = arith.constant 0 : i32
    %c0_i32_0 = arith.constant 0 : i32
    %c0_i32_1 = arith.constant 0 : i32
    return %c0_i32, %c0_i32_0 : i32, i32
  }
  func.func @transform_2(%arg0: i32, %arg1: i32) -> (i32, i32) {
    %c0_i32 = arith.constant 0 : i32
    %c0_i32_0 = arith.constant 0 : i32
    %c0_i32_1 = arith.constant 0 : i32
    return %c0_i32, %c0_i32_0 : i32, i32
  }
  func.func @transform_3(%arg0: i32, %arg1: i32) -> (i32, i32) {
    %c0_i32 = arith.constant 0 : i32
    %c0_i32_0 = arith.constant 0 : i32
    %c0_i32_1 = arith.constant 0 : i32
    return %c0_i32, %c0_i32_0 : i32, i32
  }
  func.func @transform_4(%arg0: i32, %arg1: i32) -> (i32, i32) {
    %c0_i32 = arith.constant 0 : i32
    %c0_i32_0 = arith.constant 0 : i32
    %c0_i32_1 = arith.constant 0 : i32
    return %c0_i32, %c0_i32_0 : i32, i32
  }
  func.func @transform_5(%arg0: i32, %arg1: i32) -> (i32, i32) {
    %c0_i32 = arith.constant 0 : i32
    %c0_i32_0 = arith.constant 0 : i32
    %c0_i32_1 = arith.constant 0 : i32
    return %c0_i32, %c0_i32_0 : i32, i32
  }
  func.func @transform_6(%arg0: i32, %arg1: i32) -> (i32, i32) {
    %c0_i32 = arith.constant 0 : i32
    %c0_i32_0 = arith.constant 0 : i32
    %c0_i32_1 = arith.constant 0 : i32
    return %c0_i32, %c0_i32_0 : i32, i32
  }
  func.func @transform_7(%arg0: i32, %arg1: i32) -> (i32, i32) {
    %c0_i32 = arith.constant 0 : i32
    %c0_i32_0 = arith.constant 0 : i32
    %c0_i32_1 = arith.constant 0 : i32
    return %c0_i32, %c0_i32_0 : i32, i32
  }
  func.func @transform_8(%arg0: i32, %arg1: i32) -> (i32, i32, i32) {
    %c0_i32 = arith.constant 0 : i32
    %c0_i32_0 = arith.constant 0 : i32
    return %arg0, %arg1, %c0_i32 : i32, i32, i32
  }
}

</mosaic_0001>

<llo_original>
// kernel: tpu_custom_call.1
$region0: #{tpu_custom_call.1}
  #allocation0 [shape = 'u32[]', space=smem, size = 0x4, offset = 0x4, fixed_abs, tag = 'smem constant byte address 0x4 - core index']
  #allocation1 [shape = 'u32[72,128]{1,0:T(1,128)}', space=vmem, size = 0x9000, scoped, tag = 'internal scratch']
  #allocation2 [shape = 'f32[8,32]{1,0:T(8,128)}', space=vmem, size = 0x1000, scoped, tag = 'scratch operand']
  #allocation3 [shape = 'f32[8,32]{1,0:T(8,128)}', space=vmem, size = 0x1000, scoped, tag = 'scratch operand']
  %s0 = inlined_call_operand.hbm [shape: f32[2,8,32], index: 0, kind: input, shape index: {}]
  %s1 = inlined_call_operand.hbm [shape: f32[32,32], index: 1, kind: input, shape index: {}]
  %s2 = inlined_call_operand.vmem [shape: f32[1,32], index: 2, kind: input, shape index: {}]
  %s3 = inlined_call_operand.hbm [shape: f32[32,32], index: 3, kind: input, shape index: {}]
  %s4 = inlined_call_operand.hbm [shape: f32[32,32], index: 4, kind: input, shape index: {}]
  %s5 = inlined_call_operand.vmem [shape: f32[1,32], index: 5, kind: input, shape index: {}]
  %s6 = inlined_call_operand.hbm [shape: f32[32,32], index: 6, kind: input, shape index: {}]
  %s7 = inlined_call_operand.vmem [shape: f32[1,32], index: 7, kind: input, shape index: {}]
  %s8 = inlined_call_operand.hbm [shape: f32[2,8,32], index: 8, kind: output, shape index: {}]
  %s9 = sld [smem:[#allocation0]]
  $region89: #{tpu_custom_call.1} parent=0
    _
  %s11 = ssub.s32 1, %s9
  %s12 = scalar_select 0, %s11, %s9
  $region1: #{tpu_custom_call.1} parent=0
    #allocation4 [shape = 'u8[8192]{0}', space=vmem, size = 0x2000, scoped, tag = 'input window, operand 0']
    #allocation5 [shape = 's32[2]{0}', space=sflag, size = 0x8, scoped, tag = 'scoped memory for tpu_custom_call.1']
    #allocation6 [shape = 's32[2]{0}', space=sflag, size = 0x8, scoped, tag = 'scoped memory for tpu_custom_call.1']
    #allocation7 [shape = 'u8[16384]{0}', space=vmem, size = 0x4000, scoped, tag = 'input window, operand 1, single buffered']
    #allocation8 [shape = 's32[1]{0}', space=sflag, size = 0x4, scoped, tag = 'scoped memory for tpu_custom_call.1']
    #allocation9 [shape = 'u8[16384]{0}', space=vmem, size = 0x4000, scoped, tag = 'input window, operand 3, single buffered']
    #allocation10 [shape = 'u8[16384]{0}', space=vmem, size = 0x4000, scoped, tag = 'input window, operand 4, single buffered']
    #allocation11 [shape = 's32[1]{0}', space=sflag, size = 0x4, scoped, tag = 'scoped memory for tpu_custom_call.1']
    #allocation12 [shape = 'u8[16384]{0}', space=vmem, size = 0x4000, scoped, tag = 'input window, operand 6, single buffered']
    #allocation13 [shape = 'u8[8192]{0}', space=vmem, size = 0x2000, scoped, tag = 'output window, operand 0']
    %13 = vsyncpa [#allocation5], 0
    %s14 = scalar_lea.sflag [#allocation5], 1
    %15 = vsyncpa %s14, 0
    %16 = vsyncpa [#allocation8], 0
    %17 = vsyncpa [#allocation11], 0
    %18 = vsyncpa [#allocation6], 0
    %s19 = scalar_lea.sflag [#allocation6], 1
    %20 = vsyncpa %s19, 0
    loop: start=0, step=1, limit=4
    $region2: #{tpu_custom_call.1} parent=1 // loop_pre_header
      _
    $region3: #{tpu_custom_call.1} parent=1 // loop_header
      %s22 = sphi 0, %s26
      %p23 = scmp.ge.s32.totalorder %s22, 4
      %s29 = sphi 0, %s41
      %s30 = sphi 0, %s37
      %s31 = sphi 0, %s29
      %s32 = sphi 0, %s30
      %s33 = sphi 0, %s31
      %s34 = sphi 0, %s32
      %s44 = sphi 0, %s46
      %s47 = sphi 0, %s44
      %s48 = sphi 0, %s47
      %s64 = sphi 0, %s48
      %s68 = sphi 0, %s68
      %s70 = sphi 0, %s68
      %s71 = sphi 0, %s70
      %s85 = sphi 0, %s71
      %s89 = sphi 0, %s89
      %s91 = sphi 0, %s89
      %s92 = sphi 0, %s91
      %s106 = sphi 0, %s92
      %s110 = sphi 0, %s110
      %s112 = sphi 0, %s110
      %s113 = sphi 0, %s112
      %s127 = sphi 0, %s113
      %s131 = sphi 0, %s131
      %s133 = sphi 0, %s131
      %s134 = sphi 0, %s133
      %s148 = sphi 0, %s134
      %s152 = sphi 0, %s152
      %s154 = sphi 0, %s152
      %s155 = sphi 0, %s154
      %s169 = sphi 0, %s155
      %s173 = sphi 0, %s173
      %s175 = sphi 0, %s173
      %s176 = sphi 0, %s175
      %s190 = sphi 0, %s176
      %s194 = sphi 0, %s194
      %s196 = sphi 0, %s194
      %s197 = sphi 0, %s196
      %s211 = sphi 0, %s197
      %s219 = sphi 0, %s221
      %s222 = sphi 0, %s219
      %s223 = sphi 0, %s222
      %s239 = sphi 0, %s223
    $region4: #{tpu_custom_call.1} parent=1 // loop_header_branch
      %25 = sbr.rel (%p23) target = $region8
    $region5: #{tpu_custom_call.1} parent=1 // loop_body
      %s27 = ssub.s32 %s22, 1
      %s28 = ssub.s32 %s22, 2
      %s35 = sadd.s32 1, %s30
      %p36 = scmp.ge.s32.totalorder %s35, 1
      %s37 = scalar_select %p36, 0, %s35
      %s38 = sadd.s32 1, %s29
      %s39 = scalar_select %p36, %s38, %s29
      %p40 = scmp.ge.s32.totalorder %s39, 2
      %s41 = scalar_select %p40, 0, %s39
      %s42 = ssub.s32 %s29, %s41
      %p43 = scmp.eq.s32.totalorder %s42, 0
      %s45 = sadd.s32 %s44, 1
      %s46 = scalar_select %p43, %s44, %s45
      %p49 = pneg %p43
      %p50 = scmp.eq.s32.totalorder %s22, 1
      %p51 = por %p49, %p50
      %p52 = scmp.ne.s32.totalorder %s44, %s47
      %p53 = scmp.eq.s32.totalorder %s22, 0
      %p54 = por %p52, %p53
      %p55 = scmp.ne.s32.totalorder %s44, %s47
      %p56 = scmp.eq.s32.totalorder %s27, 1
      %p57 = por %p55, %p56
      %p58 = scmp.ne.s32.totalorder %s47, %s48
      %p59 = scmp.eq.s32.totalorder %s27, 0
      %p60 = por %p58, %p59
      %p61 = scmp.ne.s32.totalorder %s47, %s48
      %p62 = scmp.eq.s32.totalorder %s28, 1
      %p63 = por %p61, %p62
      %p65 = scmp.ne.s32.totalorder %s48, %s64
      %p66 = scmp.eq.s32.totalorder %s28, 0
      %p67 = por %p65, %p66
      %s69 = sadd.s32 %s68, 1
      %p72 = scmp.eq.s32.totalorder %s22, 1
      %p73 = scmp.ne.s32.totalorder %s68, %s70
      %p74 = scmp.eq.s32.totalorder %s22, 0
      %p75 = por %p73, %p74
      %p76 = scmp.ne.s32.totalorder %s68, %s70
      %p77 = scmp.eq.s32.totalorder %s27, 1
      %p78 = por %p76, %p77
      %p79 = scmp.ne.s32.totalorder %s70, %s71
      %p80 = scmp.eq.s32.totalorder %s27, 0
      %p81 = por %p79, %p80
      %p82 = scmp.ne.s32.totalorder %s70, %s71
      %p83 = scmp.eq.s32.totalorder %s28, 1
      %p84 = por %p82, %p83
      %p86 = scmp.ne.s32.totalorder %s71, %s85
      %p87 = scmp.eq.s32.totalorder %s28, 0
      %p88 = por %p86, %p87
      %s90 = sadd.s32 %s89, 1
      %p93 = scmp.eq.s32.totalorder %s22, 1
      %p94 = scmp.ne.s32.totalorder %s89, %s91
      %p95 = scmp.eq.s32.totalorder %s22, 0
      %p96 = por %p94, %p95
      %p97 = scmp.ne.s32.totalorder %s89, %s91
      %p98 = scmp.eq.s32.totalorder %s27, 1
      %p99 = por %p97, %p98
      %p100 = scmp.ne.s32.totalorder %s91, %s92
      %p101 = scmp.eq.s32.totalorder %s27, 0
      %p102 = por %p100, %p101
      %p103 = scmp.ne.s32.totalorder %s91, %s92
      %p104 = scmp.eq.s32.totalorder %s28, 1
      %p105 = por %p103, %p104
      %p107 = scmp.ne.s32.totalorder %s92, %s106
      %p108 = scmp.eq.s32.totalorder %s28, 0
      %p109 = por %p107, %p108
      %s111 = sadd.s32 %s110, 1
      %p114 = scmp.eq.s32.totalorder %s22, 1
      %p115 = scmp.ne.s32.totalorder %s110, %s112
      %p116 = scmp.eq.s32.totalorder %s22, 0
      %p117 = por %p115, %p116
      %p118 = scmp.ne.s32.totalorder %s110, %s112
      %p119 = scmp.eq.s32.totalorder %s27, 1
      %p120 = por %p118, %p119
      %p121 = scmp.ne.s32.totalorder %s112, %s113
      %p122 = scmp.eq.s32.totalorder %s27, 0
      %p123 = por %p121, %p122
      %p124 = scmp.ne.s32.totalorder %s112, %s113
      %p125 = scmp.eq.s32.totalorder %s28, 1
      %p126 = por %p124, %p125
      %p128 = scmp.ne.s32.totalorder %s113, %s127
      %p129 = scmp.eq.s32.totalorder %s28, 0
      %p130 = por %p128, %p129
      %s132 = sadd.s32 %s131, 1
      %p135 = scmp.eq.s32.totalorder %s22, 1
      %p136 = scmp.ne.s32.totalorder %s131, %s133
      %p137 = scmp.eq.s32.totalorder %s22, 0
      %p138 = por %p136, %p137
      %p139 = scmp.ne.s32.totalorder %s131, %s133
      %p140 = scmp.eq.s32.totalorder %s27, 1
      %p141 = por %p139, %p140
      %p142 = scmp.ne.s32.totalorder %s133, %s134
      %p143 = scmp.eq.s32.totalorder %s27, 0
      %p144 = por %p142, %p143
      %p145 = scmp.ne.s32.totalorder %s133, %s134
      %p146 = scmp.eq.s32.totalorder %s28, 1
      %p147 = por %p145, %p146
      %p149 = scmp.ne.s32.totalorder %s134, %s148
      %p150 = scmp.eq.s32.totalorder %s28, 0
      %p151 = por %p149, %p150
      %s153 = sadd.s32 %s152, 1
      %p156 = scmp.eq.s32.totalorder %s22, 1
      %p157 = scmp.ne.s32.totalorder %s152, %s154
      %p158 = scmp.eq.s32.totalorder %s22, 0
      %p159 = por %p157, %p158
      %p160 = scmp.ne.s32.totalorder %s152, %s154
      %p161 = scmp.eq.s32.totalorder %s27, 1
      %p162 = por %p160, %p161
      %p163 = scmp.ne.s32.totalorder %s154, %s155
      %p164 = scmp.eq.s32.totalorder %s27, 0
      %p165 = por %p163, %p164
      %p166 = scmp.ne.s32.totalorder %s154, %s155
      %p167 = scmp.eq.s32.totalorder %s28, 1
      %p168 = por %p166, %p167
      %p170 = scmp.ne.s32.totalorder %s155, %s169
      %p171 = scmp.eq.s32.totalorder %s28, 0
      %p172 = por %p170, %p171
      %s174 = sadd.s32 %s173, 1
      %p177 = scmp.eq.s32.totalorder %s22, 1
      %p178 = scmp.ne.s32.totalorder %s173, %s175
      %p179 = scmp.eq.s32.totalorder %s22, 0
      %p180 = por %p178, %p179
      %p181 = scmp.ne.s32.totalorder %s173, %s175
      %p182 = scmp.eq.s32.totalorder %s27, 1
      %p183 = por %p181, %p182
      %p184 = scmp.ne.s32.totalorder %s175, %s176
      %p185 = scmp.eq.s32.totalorder %s27, 0
      %p186 = por %p184, %p185
      %p187 = scmp.ne.s32.totalorder %s175, %s176
      %p188 = scmp.eq.s32.totalorder %s28, 1
      %p189 = por %p187, %p188
      %p191 = scmp.ne.s32.totalorder %s176, %s190
      %p192 = scmp.eq.s32.totalorder %s28, 0
      %p193 = por %p191, %p192
      %s195 = sadd.s32 %s194, 1
      %p198 = scmp.eq.s32.totalorder %s22, 1
      %p199 = scmp.ne.s32.totalorder %s194, %s196
      %p200 = scmp.eq.s32.totalorder %s22, 0
      %p201 = por %p199, %p200
      %p202 = scmp.ne.s32.totalorder %s194, %s196
      %p203 = scmp.eq.s32.totalorder %s27, 1
      %p204 = por %p202, %p203
      %p205 = scmp.ne.s32.totalorder %s196, %s197
      %p206 = scmp.eq.s32.totalorder %s27, 0
      %p207 = por %p205, %p206
      %p208 = scmp.ne.s32.totalorder %s196, %s197
      %p209 = scmp.eq.s32.totalorder %s28, 1
      %p210 = por %p208, %p209
      %p212 = scmp.ne.s32.totalorder %s197, %s211
      %p213 = scmp.eq.s32.totalorder %s28, 0
      %p214 = por %p212, %p213
      %s215 = ssub.s32 %s29, %s41
      %s216 = ssub.s32 %s30, %s37
      %s217 = sor.u32 %s215, %s216
      %p218 = scmp.eq.s32.totalorder %s217, 0
      %s220 = sadd.s32 %s219, 1
      %s221 = scalar_select %p218, %s219, %s220
      %p224 = pneg %p218
      %p225 = scmp.eq.s32.totalorder %s22, 1
      %p226 = por %p224, %p225
      %p227 = scmp.ne.s32.totalorder %s219, %s222
      %p228 = scmp.eq.s32.totalorder %s22, 0
      %p229 = por %p227, %p228
      %p230 = scmp.ne.s32.totalorder %s219, %s222
      %p231 = scmp.eq.s32.totalorder %s27, 1
      %p232 = por %p230, %p231
      %p233 = scmp.ne.s32.totalorder %s222, %s223
      %p234 = scmp.eq.s32.totalorder %s27, 0
      %p235 = por %p233, %p234
      %p236 = scmp.ne.s32.totalorder %s222, %s223
      %p237 = scmp.eq.s32.totalorder %s28, 1
      %p238 = por %p236, %p237
      %p240 = scmp.ne.s32.totalorder %s223, %s239
      %p241 = scmp.eq.s32.totalorder %s28, 0
      %p242 = por %p240, %p241
      %p243 = scmp.le.s32.totalorder 1, %s22
      %p244 = scmp.lt.s32.totalorder %s22, 3
      %p245 = pnand %p243, %p244
      %p246 = pneg %p245
      // Predicated region
      $region9: #{tpu_custom_call.1} parent=5 // pred_check
        _
      $region10: #{tpu_custom_call.1} parent=5 // pred_check_branch
        %248 = sbr.rel (%p245) target = $region12
      $region11: #{tpu_custom_call.1} parent=5 // pred_region
        %s249 = ssub.s32 %s22, 1
        // Predicated region
        $region13: #{tpu_custom_call.1} parent=11 // pred_check
          %p250 = pneg %p81
        $region14: #{tpu_custom_call.1} parent=11 // pred_check_branch
          %252 = sbr.rel (%p250) target = $region16
        $region15: #{tpu_custom_call.1} parent=11 // pred_region
          %254 = vsyncadd [#allocation8], 0
          %s255 = sshll.u32 %s1, 4
          %s256 = int_to_ptr.hbm [resolvable:$true] %s255
          %s257 = sshll.u32 [#allocation7], 4
          %s258 = int_to_ptr.vmem [resolvable:$true] %s257
          %263 = dma.hbm_to_vmem [thread:$0]  %s256, 512, %s258, [#allocation8], 128, 128, 8
        $region16: #{tpu_custom_call.1} parent=11 // pred_fallthru
          _
        // Predicated region
        $region17: #{tpu_custom_call.1} parent=11 // pred_check
          %p264 = pneg %p102
        $region18: #{tpu_custom_call.1} parent=11 // pred_check_branch
          %266 = sbr.rel (%p264) target = $region20
        $region19: #{tpu_custom_call.1} parent=11 // pred_region
          _
        $region20: #{tpu_custom_call.1} parent=11 // pred_fallthru
          _
        // Predicated region
        $region21: #{tpu_custom_call.1} parent=11 // pred_check
          %p267 = pneg %p123
        $region22: #{tpu_custom_call.1} parent=11 // pred_check_branch
          %269 = sbr.rel (%p267) target = $region24
        $region23: #{tpu_custom_call.1} parent=11 // pred_region
          %271 = vsyncadd [#allocation8], 0
          %s272 = sshll.u32 %s3, 4
          %s273 = int_to_ptr.hbm [resolvable:$true] %s272
          %s274 = sshll.u32 [#allocation9], 4
          %s275 = int_to_ptr.vmem [resolvable:$true] %s274
          %280 = dma.hbm_to_vmem [thread:$0]  %s273, 512, %s275, [#allocation8], 128, 128, 8
        $region24: #{tpu_custom_call.1} parent=11 // pred_fallthru
          _
        // Predicated region
        $region25: #{tpu_custom_call.1} parent=11 // pred_check
          %p281 = pneg %p144
        $region26: #{tpu_custom_call.1} parent=11 // pred_check_branch
          %283 = sbr.rel (%p281) target = $region28
        $region27: #{tpu_custom_call.1} parent=11 // pred_region
          %285 = vsyncadd [#allocation11], 0
          %s286 = sshll.u32 %s4, 4
          %s287 = int_to_ptr.hbm [resolvable:$true] %s286
          %s288 = sshll.u32 [#allocation10], 4
          %s289 = int_to_ptr.vmem [resolvable:$true] %s288
          %294 = dma.hbm_to_vmem [thread:$0]  %s287, 512, %s289, [#allocation11], 128, 128, 8
        $region28: #{tpu_custom_call.1} parent=11 // pred_fallthru
          _
        // Predicated region
        $region29: #{tpu_custom_call.1} parent=11 // pred_check
          %p295 = pneg %p165
        $region30: #{tpu_custom_call.1} parent=11 // pred_check_branch
          %297 = sbr.rel (%p295) target = $region32
        $region31: #{tpu_custom_call.1} parent=11 // pred_region
          _
        $region32: #{tpu_custom_call.1} parent=11 // pred_fallthru
          _
        // Predicated region
        $region33: #{tpu_custom_call.1} parent=11 // pred_check
          %p298 = pneg %p186
        $region34: #{tpu_custom_call.1} parent=11 // pred_check_branch
          %300 = sbr.rel (%p298) target = $region36
        $region35: #{tpu_custom_call.1} parent=11 // pred_region
          %302 = vsyncadd [#allocation11], 0
          %s303 = sshll.u32 %s6, 4
          %s304 = int_to_ptr.hbm [resolvable:$true] %s303
          %s305 = sshll.u32 [#allocation12], 4
          %s306 = int_to_ptr.vmem [resolvable:$true] %s305
          %311 = dma.hbm_to_vmem [thread:$0]  %s304, 512, %s306, [#allocation11], 128, 128, 8
        $region36: #{tpu_custom_call.1} parent=11 // pred_fallthru
          _
        // Predicated region
        $region37: #{tpu_custom_call.1} parent=11 // pred_check
          %p312 = pneg %p207
        $region38: #{tpu_custom_call.1} parent=11 // pred_check_branch
          %314 = sbr.rel (%p312) target = $region40
        $region39: #{tpu_custom_call.1} parent=11 // pred_region
          _
        $region40: #{tpu_custom_call.1} parent=11 // pred_fallthru
          _
      $region12: #{tpu_custom_call.1} parent=5 // pred_fallthru
        _
      %p315 = scmp.lt.s32.totalorder %s22, 2
      // Predicated region
      $region41: #{tpu_custom_call.1} parent=5 // pred_check
        %p316 = pneg %p315
      $region42: #{tpu_custom_call.1} parent=5 // pred_check_branch
        %318 = sbr.rel (%p316) target = $region44
      $region43: #{tpu_custom_call.1} parent=5 // pred_region
        // Predicated region
        $region45: #{tpu_custom_call.1} parent=43 // pred_check
          %p319 = pneg %p54
        $region46: #{tpu_custom_call.1} parent=43 // pred_check_branch
          %321 = sbr.rel (%p319) target = $region48
        $region47: #{tpu_custom_call.1} parent=43 // pred_region
          %s322 = sand.u32 %s44, 1
          %s323 = scalar_lea.sflag [#allocation5], %s322
          %s324 = sand.u32 %s44, 1
          %s325 = smul.addr %s324, 8
          %s326 = scalar_lea.vmem [#allocation4], %s325
          %328 = vsyncadd %s323, 0
          %s329 = smul.addr %s29, 8
          %s330 = scalar_lea.hbm %s0, %s329
          %s332 = sshll.u32 %s330, 4
          %s333 = int_to_ptr.hbm [resolvable:$true] %s332
          %s334 = sshll.u32 %s326, 4
          %s335 = int_to_ptr.vmem [resolvable:$true] %s334
          %337 = dma.hbm_to_vmem [thread:$0]  %s333, 128, %s335, %s323
        $region48: #{tpu_custom_call.1} parent=43 // pred_fallthru
          _
      $region44: #{tpu_custom_call.1} parent=5 // pred_fallthru
        _
      %p338 = scmp.le.s32.totalorder 1, %s22
      %p339 = scmp.lt.s32.totalorder %s22, 3
      %p340 = pnand %p338, %p339
      %p341 = pneg %p340
      // Predicated region
      $region49: #{tpu_custom_call.1} parent=5 // pred_check
        _
      $region50: #{tpu_custom_call.1} parent=5 // pred_check_branch
        %343 = sbr.rel (%p340) target = $region52
      $region51: #{tpu_custom_call.1} parent=5 // pred_region
        %s344 = ssub.s32 %s22, 1
        %s345 = sand.u32 %s47, 1
        %s346 = scalar_lea.sflag [#allocation5], %s345
        %s347 = sand.u32 %s47, 1
        %s348 = smul.addr %s347, 8
        %s349 = scalar_lea.vmem [#allocation4], %s348
        // Predicated region
        $region53: #{tpu_custom_call.1} parent=51 // pred_check
          %p350 = pneg %p60
        $region54: #{tpu_custom_call.1} parent=51 // pred_check_branch
          %352 = sbr.rel (%p350) target = $region56
        $region55: #{tpu_custom_call.1} parent=51 // pred_region
          %354 = dma.done %s346, 128
        $region56: #{tpu_custom_call.1} parent=51 // pred_fallthru
          _
        // Predicated region
        $region57: #{tpu_custom_call.1} parent=51 // pred_check
          %p355 = pneg %p81
        $region58: #{tpu_custom_call.1} parent=51 // pred_check_branch
          %357 = sbr.rel (%p355) target = $region60
        $region59: #{tpu_custom_call.1} parent=51 // pred_region
          %359 = dma.done [#allocation8], 512
        $region60: #{tpu_custom_call.1} parent=51 // pred_fallthru
          _
        // Predicated region
        $region61: #{tpu_custom_call.1} parent=51 // pred_check
          %p360 = pneg %p123
        $region62: #{tpu_custom_call.1} parent=51 // pred_check_branch
          %362 = sbr.rel (%p360) target = $region64
        $region63: #{tpu_custom_call.1} parent=51 // pred_region
          %364 = dma.done [#allocation8], 512
        $region64: #{tpu_custom_call.1} parent=51 // pred_fallthru
          _
        // Predicated region
        $region65: #{tpu_custom_call.1} parent=51 // pred_check
          %p365 = pneg %p144
        $region66: #{tpu_custom_call.1} parent=51 // pred_check_branch
          %367 = sbr.rel (%p365) target = $region68
        $region67: #{tpu_custom_call.1} parent=51 // pred_region
          %369 = dma.done [#allocation11], 512
        $region68: #{tpu_custom_call.1} parent=51 // pred_fallthru
          _
        // Predicated region
        $region69: #{tpu_custom_call.1} parent=51 // pred_check
          %p370 = pneg %p186
        $region70: #{tpu_custom_call.1} parent=51 // pred_check_branch
          %372 = sbr.rel (%p370) target = $region72
        $region71: #{tpu_custom_call.1} parent=51 // pred_region
          %374 = dma.done [#allocation11], 512
        $region72: #{tpu_custom_call.1} parent=51 // pred_fallthru
          _
        %s375 = sand.u32 %s47, 1
        %s376 = scalar_lea.sflag [#allocation5], %s375
        %s377 = sand.u32 %s47, 1
        %s378 = smul.addr %s377, 8
        %s379 = scalar_lea.vmem [#allocation4], %s378
        %p380 = pneg %p60
        %p381 = pneg %p57
        %p382 = pneg %p81
        %p383 = pneg %p78
        %p384 = pneg %p102
        %p385 = pneg %p99
        %p386 = pneg %p123
        %p387 = pneg %p120
        %p388 = pneg %p144
        %p389 = pneg %p141
        %p390 = pneg %p165
        %p391 = pneg %p162
        %p392 = pneg %p186
        %p393 = pneg %p183
        %p394 = pneg %p207
        %p395 = pneg %p204
        %p396 = pneg %p235
        %p397 = pneg %p232
        %s398 = sand.u32 %s222, 1
        %s399 = scalar_lea.sflag [#allocation6], %s398
        %s400 = sand.u32 %s222, 1
        %s401 = smul.addr %s400, 8
        %s402 = scalar_lea.vmem [#allocation13], %s401
        %p403 = scmp.eq.s32.totalorder %s32, 0
        // Predicated region
        $region73: #{tpu_custom_call.1} parent=51 // pred_check
          %p404 = pneg %p403
        $region74: #{tpu_custom_call.1} parent=51 // pred_check_branch
          %406 = sbr.rel (%p404) target = $region76
        $region75: #{tpu_custom_call.1} parent=51 // pred_region
          %v407 = vld [vmem:[%s349] sm:$0xff]
          %v408 = vld [vmem:[#allocation9] sm:$0xff]
          %v409 = vld [vmem:[#allocation9 + $0x8] sm:$0xff]
          %v410 = vld [vmem:[#allocation9 + $0x10] sm:$0xff]
          %v411 = vld [vmem:[#allocation9 + $0x18] sm:$0xff]
          %vm412 = vcmask 261120
          %v414 = vsel %vm412, %v407, 0
          %416 = vmatpush.msra.mxu0 0.0
          %417 = vmatpush.msra.mxu0 0.0
          %418 = vmatpush.msra.mxu0 0.0
          %419 = vmatpush.msra.mxu0 0.0
          %420 = vmatpush.msra.mxu0 0.0
          %421 = vmatpush.msra.mxu0 0.0
          %422 = vmatpush.msra.mxu0 0.0
          %423 = vmatpush.msra.mxu0 0.0
          %424 = vmatpush.msra.mxu0 0.0
          %425 = vmatpush.msra.mxu0 0.0
          %426 = vmatpush.msra.mxu0 0.0
          %427 = vmatpush.msra.mxu0 0.0
          %428 = vmatpush.msra.mxu0 %v411
          %429 = vmatpush.msra.mxu0 %v410
          %430 = vmatpush.msra.mxu0 %v409
          %431 = vmatpush.msra.mxu0 %v408
          %432 = vmatmul.f32.gmra.mxu0 %v414
          %v433 = vpop.f32.mrf.mxu0
          %v434 = vadd.f32 0.0, %v433
          %435 = vdwg.mxu0
          %436 = vst.msk [vmem:[#allocation2] sm:$0xff] %vm412, %v434
          %v437 = vld [vmem:[#allocation10] sm:$0xff]
          %v438 = vld [vmem:[#allocation10 + $0x8] sm:$0xff]
          %v439 = vld [vmem:[#allocation10 + $0x10] sm:$0xff]
          %v440 = vld [vmem:[#allocation10 + $0x18] sm:$0xff]
          %v441 = vld [vmem:[%s5] sm:$0x1]
          %v443 = vperm.slane %v441, 0
          %445 = vmatpush.msra.mxu0 0.0
          %446 = vmatpush.msra.mxu0 0.0
          %447 = vmatpush.msra.mxu0 0.0
          %448 = vmatpush.msra.mxu0 0.0
          %449 = vmatpush.msra.mxu0 0.0
          %450 = vmatpush.msra.mxu0 0.0
          %451 = vmatpush.msra.mxu0 0.0
          %452 = vmatpush.msra.mxu0 0.0
          %453 = vmatpush.msra.mxu0 0.0
          %454 = vmatpush.msra.mxu0 0.0
          %455 = vmatpush.msra.mxu0 0.0
          %456 = vmatpush.msra.mxu0 0.0
          %457 = vmatpush.msra.mxu0 %v440
          %458 = vmatpush.msra.mxu0 %v439
          %459 = vmatpush.msra.mxu0 %v438
          %460 = vmatpush.msra.mxu0 %v437
          %461 = vmatmul.f32.gmra.mxu0 %v414
          %v462 = vpop.f32.mrf.mxu0
          %v463 = vadd.f32 %v443, %v462
          %464 = vdwg.mxu0
          %465 = vst.msk [vmem:[#allocation3] sm:$0xff] %vm412, %v463
        $region76: #{tpu_custom_call.1} parent=51 // pred_fallthru
          _
        %s466 = smul.u32 %s32, 8
        %s467 = scalar_lea.vmem %s349, %s466 [#allocation4]
        %v468 = vld [vmem:[%s467] sm:$0xff]
        %v469 = vld [vmem:[#allocation7] sm:$0xff]
        %v470 = vld [vmem:[#allocation7 + $0x8] sm:$0xff]
        %v471 = vld [vmem:[#allocation7 + $0x10] sm:$0xff]
        %v472 = vld [vmem:[#allocation7 + $0x18] sm:$0xff]
        %v473 = vld [vmem:[%s2] sm:$0x1]
        %v475 = vperm.slane %v473, 0
        %vm477 = vcmask 261120
        %v479 = vsel %vm477, %v468, 0
        %481 = vmatpush.msra.mxu0 0.0
        %482 = vmatpush.msra.mxu0 0.0
        %483 = vmatpush.msra.mxu0 0.0
        %484 = vmatpush.msra.mxu0 0.0
        %485 = vmatpush.msra.mxu0 0.0
        %486 = vmatpush.msra.mxu0 0.0
        %487 = vmatpush.msra.mxu0 0.0
        %488 = vmatpush.msra.mxu0 0.0
        %489 = vmatpush.msra.mxu0 0.0
        %490 = vmatpush.msra.mxu0 0.0
        %491 = vmatpush.msra.mxu0 0.0
        %492 = vmatpush.msra.mxu0 0.0
        %493 = vmatpush.msra.mxu0 %v472
        %494 = vmatpush.msra.mxu0 %v471
        %495 = vmatpush.msra.mxu0 %v470
        %496 = vmatpush.msra.mxu0 %v469
        %497 = vmatmul.f32.gmra.mxu0 %v479
        %v498 = vpop.f32.mrf.mxu0
        %v499 = vadd.f32 %v475, %v498
        %500 = vdwg.mxu0
        %v501 = vlaneseq
        %v502 = vshrl.u32 %v501, 7
        %v503 = vstv %s466
        %v504 = vadd.s32 %v503, %v502
        %v505 = vlaneseq
        %v506 = vand.u32 %v505, 127
        %vm507 = vcmp.le.s32.totalorder %v506, %v504
        %v508 = vld [vmem:[#allocation2] sm:$0xff]
        %v509 = vld [vmem:[#allocation3] sm:$0xff]
        %vm510 = vcmask 64512
        %v512 = vsel %vm510, %v499, 0
        %v515 = vsel %vm510, %v508, 0
        %517 = vmatpush.xpose.msra.mxu0 0.0
        %518 = vmatpush.xpose.msra.mxu0 0.0
        %519 = vmatpush.xpose.msra.mxu0 0.0
        %520 = vmatpush.xpose.msra.mxu0 0.0
        %521 = vmatpush.xpose.msra.mxu0 0.0
        %522 = vmatpush.xpose.msra.mxu0 0.0
        %523 = vmatpush.xpose.msra.mxu0 0.0
        %524 = vmatpush.xpose.msra.mxu0 0.0
        %525 = vmatpush.xpose.msra.mxu0 0.0
        %526 = vmatpush.xpose.msra.mxu0 0.0
        %527 = vmatpush.xpose.msra.mxu0 0.0
        %528 = vmatpush.xpose.msra.mxu0 0.0
        %529 = vmatpush.xpose.msra.mxu0 0.0
        %530 = vmatpush.xpose.msra.mxu0 0.0
        %531 = vmatpush.xpose.msra.mxu0 0.0
        %532 = vmatpush.xpose.msra.mxu0 %v515
        %533 = vmatmul.f32.gmra.mxu0 %v512
        %v534 = vpop.f32.mrf.mxu0
        %v535 = vadd.f32 0.0, %v534
        %536 = vdwg.mxu0
        %v537 = vsel %vm507, %v535, -inf
        %v538 = vsel %vm510, %v537, -inf
        %539 = vmax.xlane.f32.xlu0 %v538
        %v540 = vpop.xlane.xlu0 %539
        %v541 = vsub.f32 %v537, %v540
        %v542 = vmul.f32 %v541, 1.442695
        %v543 = vpow.pop %v542
        %v544 = vsel %vm510, %v543, 0.0
        %545 = vadd.xlane.f32.xlu0 %v544
        %v546 = vpop.xlane.xlu0 %545
        %v547 = vrcp.pop %v546
        %v548 = vmul.f32 %v546, %v547
        %v549 = vsub.f32 1.0, %v548
        %v550 = vmul.f32 %v547, %v549
        %v551 = vadd.f32 %v547, %v550
        %vm552 = vweird.f32 %v546
        %vm553 = vweird.f32 %v547
        %vm554 = vmor %vm552, %vm553
        %v555 = vsel %vm554, %v547, %v551
        %v556 = vand.u32 2147483647, %v546
        %vm557 = vcmp.eq.f32.partialorder %v556, 8.507059e+37
        %v558 = vand.u32 %v546, 2147483648
        %v559 = vor.u32 1.1754944e-38, %v558
        %v560 = vsel %vm557, %v559, %v555
        %v561 = vmul.f32 %v543, %v560
        %v563 = vsel %vm510, %v561, 0
        %565 = vmatpush.msra.mxu0 0.0
        %566 = vmatpush.msra.mxu0 0.0
        %567 = vmatpush.msra.mxu0 0.0
        %568 = vmatpush.msra.mxu0 0.0
        %569 = vmatpush.msra.mxu0 0.0
        %570 = vmatpush.msra.mxu0 0.0
        %571 = vmatpush.msra.mxu0 0.0
        %572 = vmatpush.msra.mxu0 0.0
        %573 = vmatpush.msra.mxu0 0.0
        %574 = vmatpush.msra.mxu0 0.0
        %575 = vmatpush.msra.mxu0 0.0
        %576 = vmatpush.msra.mxu0 0.0
        %577 = vmatpush.msra.mxu0 0.0
        %578 = vmatpush.msra.mxu0 0.0
        %579 = vmatpush.msra.mxu0 0.0
        %580 = vmatpush.msra.mxu0 %v509
        %581 = vmatmul.f32.gmra.mxu0 %v563
        %v582 = vpop.f32.mrf.mxu0
        %v583 = vadd.f32 0.0, %v582
        %584 = vdwg.mxu0
        %v585 = vld [vmem:[#allocation12] sm:$0xff]
        %v586 = vld [vmem:[#allocation2] sm:$0xff]
        %v587 = vld [vmem:[#allocation3] sm:$0xff]
        %588 = vrot.lane.b32.xlu0 %v499, 120
        %v589 = vpop.permute.xlu0 %588
        %591 = vrot.lane.b32.xlu0 %v586, 120
        %v592 = vpop.permute.xlu0 %591
        %v593 = vsel %vm510, %v589, 0
        %v595 = vsel %vm510, %v592, 0
        %597 = vmatpush.xpose.msra.mxu0 0.0
        %598 = vmatpush.xpose.msra.mxu0 0.0
        %599 = vmatpush.xpose.msra.mxu0 0.0
        %600 = vmatpush.xpose.msra.mxu0 0.0
        %601 = vmatpush.xpose.msra.mxu0 0.0
        %602 = vmatpush.xpose.msra.mxu0 0.0
        %603 = vmatpush.xpose.msra.mxu0 0.0
        %604 = vmatpush.xpose.msra.mxu0 0.0
        %605 = vmatpush.xpose.msra.mxu0 0.0
        %606 = vmatpush.xpose.msra.mxu0 0.0
        %607 = vmatpush.xpose.msra.mxu0 0.0
        %608 = vmatpush.xpose.msra.mxu0 0.0
        %609 = vmatpush.xpose.msra.mxu0 0.0
        %610 = vmatpush.xpose.msra.mxu0 0.0
        %611 = vmatpush.xpose.msra.mxu0 0.0
        %612 = vmatpush.xpose.msra.mxu0 %v595
        %613 = vmatmul.f32.gmra.mxu0 %v593
        %v614 = vpop.f32.mrf.mxu0
        %v615 = vadd.f32 0.0, %v614
        %616 = vdwg.mxu0
        %v617 = vsel %vm507, %v615, -inf
        %v618 = vsel %vm510, %v617, -inf
        %619 = vmax.xlane.f32.xlu0 %v618
        %v620 = vpop.xlane.xlu0 %619
        %v621 = vsub.f32 %v617, %v620
        %v622 = vmul.f32 %v621, 1.442695
        %v623 = vpow.pop %v622
        %v624 = vsel %vm510, %v623, 0.0
        %625 = vadd.xlane.f32.xlu0 %v624
        %v626 = vpop.xlane.xlu0 %625
        %v627 = vrcp.pop %v626
        %v628 = vmul.f32 %v626, %v627
        %v629 = vsub.f32 1.0, %v628
        %v630 = vmul.f32 %v627, %v629
        %v631 = vadd.f32 %v627, %v630
        %vm632 = vweird.f32 %v626
        %vm633 = vweird.f32 %v627
        %vm634 = vmor %vm632, %vm633
        %v635 = vsel %vm634, %v627, %v631
        %v636 = vand.u32 2147483647, %v626
        %vm637 = vcmp.eq.f32.partialorder %v636, 8.507059e+37
        %v638 = vand.u32 %v626, 2147483648
        %v639 = vor.u32 1.1754944e-38, %v638
        %v640 = vsel %vm637, %v639, %v635
        %v641 = vmul.f32 %v623, %v640
        %643 = vrot.lane.b32.xlu0 %v587, 120
        %v644 = vpop.permute.xlu0 %643
        %v647 = vsel %vm510, %v641, 0
        %649 = vmatpush.msra.mxu0 0.0
        %650 = vmatpush.msra.mxu0 0.0
        %651 = vmatpush.msra.mxu0 0.0
        %652 = vmatpush.msra.mxu0 0.0
        %653 = vmatpush.msra.mxu0 0.0
        %654 = vmatpush.msra.mxu0 0.0
        %655 = vmatpush.msra.mxu0 0.0
        %656 = vmatpush.msra.mxu0 0.0
        %657 = vmatpush.msra.mxu0 0.0
        %658 = vmatpush.msra.mxu0 0.0
        %659 = vmatpush.msra.mxu0 0.0
        %660 = vmatpush.msra.mxu0 0.0
        %661 = vmatpush.msra.mxu0 0.0
        %662 = vmatpush.msra.mxu0 0.0
        %663 = vmatpush.msra.mxu0 0.0
        %664 = vmatpush.msra.mxu0 %v644
        %665 = vmatmul.f32.gmra.mxu0 %v647
        %v666 = vpop.f32.mrf.mxu0
        %v667 = vadd.f32 0.0, %v666
        %668 = vdwg.mxu0
        %v669 = vld [vmem:[#allocation12 + $0x8] sm:$0xff]
        %v671 = vsel %vm510, %v667, 0
        %673 = vmatpush.msra.mxu0 0.0
        %674 = vmatpush.msra.mxu0 0.0
        %675 = vmatpush.msra.mxu0 0.0
        %676 = vmatpush.msra.mxu0 0.0
        %677 = vmatpush.msra.mxu0 0.0
        %678 = vmatpush.msra.mxu0 0.0
        %679 = vmatpush.msra.mxu0 0.0
        %680 = vmatpush.msra.mxu0 0.0
        %681 = vmatpush.msra.mxu0 0.0
        %682 = vmatpush.msra.mxu0 0.0
        %683 = vmatpush.msra.mxu0 0.0
        %684 = vmatpush.msra.mxu0 0.0
        %685 = vmatpush.msra.mxu0 0.0
        %686 = vmatpush.msra.mxu0 0.0
        %687 = vmatpush.msra.mxu0 0.0
        %688 = vmatpush.msra.mxu0 %v669
        %689 = vmatmul.f32.gmra.mxu0 %v671
        %v690 = vpop.f32.mrf.mxu0
        %v691 = vadd.f32 0.0, %v690
        %692 = vdwg.mxu0
        %v694 = vsel %vm510, %v583, 0
        %696 = vmatpush.msra.mxu0 0.0
        %697 = vmatpush.msra.mxu0 0.0
        %698 = vmatpush.msra.mxu0 0.0
        %699 = vmatpush.msra.mxu0 0.0
        %700 = vmatpush.msra.mxu0 0.0
        %701 = vmatpush.msra.mxu0 0.0
        %702 = vmatpush.msra.mxu0 0.0
        %703 = vmatpush.msra.mxu0 0.0
        %704 = vmatpush.msra.mxu0 0.0
        %705 = vmatpush.msra.mxu0 0.0
        %706 = vmatpush.msra.mxu0 0.0
        %707 = vmatpush.msra.mxu0 0.0
        %708 = vmatpush.msra.mxu0 0.0
        %709 = vmatpush.msra.mxu0 0.0
        %710 = vmatpush.msra.mxu0 0.0
        %711 = vmatpush.msra.mxu0 %v585
        %712 = vmatmul.f32.gmra.mxu0 %v694
        %v713 = vpop.f32.mrf.mxu0
        %v714 = vadd.f32 %v691, %v713
        %715 = vdwg.mxu0
        %v716 = vld [vmem:[#allocation2] sm:$0xff]
        %v717 = vld [vmem:[#allocation3] sm:$0xff]
        %718 = vrot.lane.b32.xlu0 %v499, 112
        %v719 = vpop.permute.xlu0 %718
        %721 = vrot.lane.b32.xlu0 %v716, 112
        %v722 = vpop.permute.xlu0 %721
        %v723 = vsel %vm510, %v719, 0
        %v725 = vsel %vm510, %v722, 0
        %727 = vmatpush.xpose.msra.mxu0 0.0
        %728 = vmatpush.xpose.msra.mxu0 0.0
        %729 = vmatpush.xpose.msra.mxu0 0.0
        %730 = vmatpush.xpose.msra.mxu0 0.0
        %731 = vmatpush.xpose.msra.mxu0 0.0
        %732 = vmatpush.xpose.msra.mxu0 0.0
        %733 = vmatpush.xpose.msra.mxu0 0.0
        %734 = vmatpush.xpose.msra.mxu0 0.0
        %735 = vmatpush.xpose.msra.mxu0 0.0
        %736 = vmatpush.xpose.msra.mxu0 0.0
        %737 = vmatpush.xpose.msra.mxu0 0.0
        %738 = vmatpush.xpose.msra.mxu0 0.0
        %739 = vmatpush.xpose.msra.mxu0 0.0
        %740 = vmatpush.xpose.msra.mxu0 0.0
        %741 = vmatpush.xpose.msra.mxu0 0.0
        %742 = vmatpush.xpose.msra.mxu0 %v725
        %743 = vmatmul.f32.gmra.mxu0 %v723
        %v744 = vpop.f32.mrf.mxu0
        %v745 = vadd.f32 0.0, %v744
        %746 = vdwg.mxu0
        %v747 = vsel %vm507, %v745, -inf
        %v748 = vsel %vm510, %v747, -inf
        %749 = vmax.xlane.f32.xlu0 %v748
        %v750 = vpop.xlane.xlu0 %749
        %v751 = vsub.f32 %v747, %v750
        %v752 = vmul.f32 %v751, 1.442695
        %v753 = vpow.pop %v752
        %v754 = vsel %vm510, %v753, 0.0
        %755 = vadd.xlane.f32.xlu0 %v754
        %v756 = vpop.xlane.xlu0 %755
        %v757 = vrcp.pop %v756
        %v758 = vmul.f32 %v756, %v757
        %v759 = vsub.f32 1.0, %v758
        %v760 = vmul.f32 %v757, %v759
        %v761 = vadd.f32 %v757, %v760
        %vm762 = vweird.f32 %v756
        %vm763 = vweird.f32 %v757
        %vm764 = vmor %vm762, %vm763
        %v765 = vsel %vm764, %v757, %v761
        %v766 = vand.u32 2147483647, %v756
        %vm767 = vcmp.eq.f32.partialorder %v766, 8.507059e+37
        %v768 = vand.u32 %v756, 2147483648
        %v769 = vor.u32 1.1754944e-38, %v768
        %v770 = vsel %vm767, %v769, %v765
        %v771 = vmul.f32 %v753, %v770
        %773 = vrot.lane.b32.xlu0 %v717, 112
        %v774 = vpop.permute.xlu0 %773
        %v777 = vsel %vm510, %v771, 0
        %779 = vmatpush.msra.mxu0 0.0
        %780 = vmatpush.msra.mxu0 0.0
        %781 = vmatpush.msra.mxu0 0.0
        %782 = vmatpush.msra.mxu0 0.0
        %783 = vmatpush.msra.mxu0 0.0
        %784 = vmatpush.msra.mxu0 0.0
        %785 = vmatpush.msra.mxu0 0.0
        %786 = vmatpush.msra.mxu0 0.0
        %787 = vmatpush.msra.mxu0 0.0
        %788 = vmatpush.msra.mxu0 0.0
        %789 = vmatpush.msra.mxu0 0.0
        %790 = vmatpush.msra.mxu0 0.0
        %791 = vmatpush.msra.mxu0 0.0
        %792 = vmatpush.msra.mxu0 0.0
        %793 = vmatpush.msra.mxu0 0.0
        %794 = vmatpush.msra.mxu0 %v774
        %795 = vmatmul.f32.gmra.mxu0 %v777
        %v796 = vpop.f32.mrf.mxu0
        %v797 = vadd.f32 0.0, %v796
        %798 = vdwg.mxu0
        %v799 = vld [vmem:[#allocation12 + $0x10] sm:$0xff]
        %v801 = vsel %vm510, %v797, 0
        %803 = vmatpush.msra.mxu0 0.0
        %804 = vmatpush.msra.mxu0 0.0
        %805 = vmatpush.msra.mxu0 0.0
        %806 = vmatpush.msra.mxu0 0.0
        %807 = vmatpush.msra.mxu0 0.0
        %808 = vmatpush.msra.mxu0 0.0
        %809 = vmatpush.msra.mxu0 0.0
        %810 = vmatpush.msra.mxu0 0.0
        %811 = vmatpush.msra.mxu0 0.0
        %812 = vmatpush.msra.mxu0 0.0
        %813 = vmatpush.msra.mxu0 0.0
        %814 = vmatpush.msra.mxu0 0.0
        %815 = vmatpush.msra.mxu0 0.0
        %816 = vmatpush.msra.mxu0 0.0
        %817 = vmatpush.msra.mxu0 0.0
        %818 = vmatpush.msra.mxu0 %v799
        %819 = vmatmul.f32.gmra.mxu0 %v801
        %v820 = vpop.f32.mrf.mxu0
        %v821 = vadd.f32 0.0, %v820
        %822 = vdwg.mxu0
        %v823 = vadd.f32 %v714, %v821
        %v824 = vld [vmem:[#allocation2] sm:$0xff]
        %v825 = vld [vmem:[#allocation3] sm:$0xff]
        %826 = vrot.lane.b32.xlu0 %v499, 104
        %v827 = vpop.permute.xlu0 %826
        %829 = vrot.lane.b32.xlu0 %v824, 104
        %v830 = vpop.permute.xlu0 %829
        %v831 = vsel %vm510, %v827, 0
        %v833 = vsel %vm510, %v830, 0
        %835 = vmatpush.xpose.msra.mxu0 0.0
        %836 = vmatpush.xpose.msra.mxu0 0.0
        %837 = vmatpush.xpose.msra.mxu0 0.0
        %838 = vmatpush.xpose.msra.mxu0 0.0
        %839 = vmatpush.xpose.msra.mxu0 0.0
        %840 = vmatpush.xpose.msra.mxu0 0.0
        %841 = vmatpush.xpose.msra.mxu0 0.0
        %842 = vmatpush.xpose.msra.mxu0 0.0
        %843 = vmatpush.xpose.msra.mxu0 0.0
        %844 = vmatpush.xpose.msra.mxu0 0.0
        %845 = vmatpush.xpose.msra.mxu0 0.0
        %846 = vmatpush.xpose.msra.mxu0 0.0
        %847 = vmatpush.xpose.msra.mxu0 0.0
        %848 = vmatpush.xpose.msra.mxu0 0.0
        %849 = vmatpush.xpose.msra.mxu0 0.0
        %850 = vmatpush.xpose.msra.mxu0 %v833
        %851 = vmatmul.f32.gmra.mxu0 %v831
        %v852 = vpop.f32.mrf.mxu0
        %v853 = vadd.f32 0.0, %v852
        %854 = vdwg.mxu0
        %v855 = vsel %vm507, %v853, -inf
        %v856 = vsel %vm510, %v855, -inf
        %857 = vmax.xlane.f32.xlu0 %v856
        %v858 = vpop.xlane.xlu0 %857
        %v859 = vsub.f32 %v855, %v858
        %v860 = vmul.f32 %v859, 1.442695
        %v861 = vpow.pop %v860
        %v862 = vsel %vm510, %v861, 0.0
        %863 = vadd.xlane.f32.xlu0 %v862
        %v864 = vpop.xlane.xlu0 %863
        %v865 = vrcp.pop %v864
        %v866 = vmul.f32 %v864, %v865
        %v867 = vsub.f32 1.0, %v866
        %v868 = vmul.f32 %v865, %v867
        %v869 = vadd.f32 %v865, %v868
        %vm870 = vweird.f32 %v864
        %vm871 = vweird.f32 %v865
        %vm872 = vmor %vm870, %vm871
        %v873 = vsel %vm872, %v865, %v869
        %v874 = vand.u32 2147483647, %v864
        %vm875 = vcmp.eq.f32.partialorder %v874, 8.507059e+37
        %v876 = vand.u32 %v864, 2147483648
        %v877 = vor.u32 1.1754944e-38, %v876
        %v878 = vsel %vm875, %v877, %v873
        %v879 = vmul.f32 %v861, %v878
        %881 = vrot.lane.b32.xlu0 %v825, 104
        %v882 = vpop.permute.xlu0 %881
        %v885 = vsel %vm510, %v879, 0
        %887 = vmatpush.msra.mxu0 0.0
        %888 = vmatpush.msra.mxu0 0.0
        %889 = vmatpush.msra.mxu0 0.0
        %890 = vmatpush.msra.mxu0 0.0
        %891 = vmatpush.msra.mxu0 0.0
        %892 = vmatpush.msra.mxu0 0.0
        %893 = vmatpush.msra.mxu0 0.0
        %894 = vmatpush.msra.mxu0 0.0
        %895 = vmatpush.msra.mxu0 0.0
        %896 = vmatpush.msra.mxu0 0.0
        %897 = vmatpush.msra.mxu0 0.0
        %898 = vmatpush.msra.mxu0 0.0
        %899 = vmatpush.msra.mxu0 0.0
        %900 = vmatpush.msra.mxu0 0.0
        %901 = vmatpush.msra.mxu0 0.0
        %902 = vmatpush.msra.mxu0 %v882
        %903 = vmatmul.f32.gmra.mxu0 %v885
        %v904 = vpop.f32.mrf.mxu0
        %v905 = vadd.f32 0.0, %v904
        %906 = vdwg.mxu0
        %v907 = vld [vmem:[#allocation12 + $0x18] sm:$0xff]
        %v909 = vsel %vm510, %v905, 0
        %911 = vmatpush.msra.mxu0 0.0
        %912 = vmatpush.msra.mxu0 0.0
        %913 = vmatpush.msra.mxu0 0.0
        %914 = vmatpush.msra.mxu0 0.0
        %915 = vmatpush.msra.mxu0 0.0
        %916 = vmatpush.msra.mxu0 0.0
        %917 = vmatpush.msra.mxu0 0.0
        %918 = vmatpush.msra.mxu0 0.0
        %919 = vmatpush.msra.mxu0 0.0
        %920 = vmatpush.msra.mxu0 0.0
        %921 = vmatpush.msra.mxu0 0.0
        %922 = vmatpush.msra.mxu0 0.0
        %923 = vmatpush.msra.mxu0 0.0
        %924 = vmatpush.msra.mxu0 0.0
        %925 = vmatpush.msra.mxu0 0.0
        %926 = vmatpush.msra.mxu0 %v907
        %927 = vmatmul.f32.gmra.mxu0 %v909
        %v928 = vpop.f32.mrf.mxu0
        %v929 = vadd.f32 0.0, %v928
        %930 = vdwg.mxu0
        %v931 = vadd.f32 %v823, %v929
        %v932 = vld [vmem:[%s7] sm:$0x1]
        %v934 = vperm.slane %v932, 0
        %v936 = vadd.f32 %v931, %v934
        %937 = vst.msk [vmem:[%s402] sm:$0xff] %vm477, %v936
        %s938 = sand.u32 %s222, 1
        %s939 = scalar_lea.sflag [#allocation6], %s938
        %s940 = sand.u32 %s222, 1
        %s941 = smul.addr %s940, 8
        %s942 = scalar_lea.vmem [#allocation13], %s941
        // Predicated region
        $region77: #{tpu_custom_call.1} parent=51 // pred_check
          %p943 = pneg %p232
        $region78: #{tpu_custom_call.1} parent=51 // pred_check_branch
          %945 = sbr.rel (%p943) target = $region80
        $region79: #{tpu_custom_call.1} parent=51 // pred_region
          %947 = vsyncadd %s939, 0
          %s948 = sadd.s32 %s32, %s31
          %s949 = smul.addr %s948, 8
          %s950 = scalar_lea.hbm %s8, %s949
          %s952 = sshll.u32 %s942, 4
          %s953 = int_to_ptr.vmem [resolvable:$true] %s952
          %s954 = sshll.u32 %s950, 4
          %s955 = int_to_ptr.hbm [resolvable:$true] %s954
          %957 = dma.vmem_to_hbm [thread:$0]  %s953, 128, %s955, %s939
        $region80: #{tpu_custom_call.1} parent=51 // pred_fallthru
          _
      $region52: #{tpu_custom_call.1} parent=5 // pred_fallthru
        _
      %p958 = scmp.le.s32.totalorder 2, %s22
      // Predicated region
      $region81: #{tpu_custom_call.1} parent=5 // pred_check
        %p959 = pneg %p958
      $region82: #{tpu_custom_call.1} parent=5 // pred_check_branch
        %961 = sbr.rel (%p959) target = $region84
      $region83: #{tpu_custom_call.1} parent=5 // pred_region
        %s962 = ssub.s32 %s22, 2
        // Predicated region
        $region85: #{tpu_custom_call.1} parent=83 // pred_check
          %p963 = pneg %p238
        $region86: #{tpu_custom_call.1} parent=83 // pred_check_branch
          %965 = sbr.rel (%p963) target = $region88
        $region87: #{tpu_custom_call.1} parent=83 // pred_region
          %s966 = sand.u32 %s223, 1
          %s967 = scalar_lea.sflag [#allocation6], %s966
          %s968 = sand.u32 %s223, 1
          %s969 = smul.addr %s968, 8
          %s970 = scalar_lea.vmem [#allocation13], %s969
          %972 = dma.done %s967, 128
        $region88: #{tpu_custom_call.1} parent=83 // pred_fallthru
          _
      $region84: #{tpu_custom_call.1} parent=5 // pred_fallthru
        _
    $region6: #{tpu_custom_call.1} parent=1 // loop_footer
      %s26 = sadd.s32 1, %s22
    $region7: #{tpu_custom_call.1} parent=1 // loop_footer_branch
      %21 = sbr.rel target = $region3
    $region8: #{tpu_custom_call.1} parent=1 // loop_exit
      _
    %973 = vsyncpa [#allocation5], 1
    %s974 = scalar_lea.sflag [#allocation5], 1
    %975 = vsyncpa %s974, 1
    %976 = vsyncpa [#allocation8], 1
    %977 = vsyncpa [#allocation11], 1
    %978 = vsyncpa [#allocation6], 1
    %s979 = scalar_lea.sflag [#allocation6], 1
    %980 = vsyncpa %s979, 1

</llo_original>
